<compile_context>
chip_gen: v6e
topology: v6e:2x2x1
jax: 0.10.0
libtpu: 0.0.40
codegen_flags: <defaults>
</compile_context>

<pallas_src>
import jax
import jax.numpy as jnp
import numpy as np
from jax.experimental import pallas as pl
from jax.experimental.pallas import tpu as pltpu

POOL = 4                       # nn.AvgPool2d(4)
_MiB = 1024 * 1024


# --------------------------------------------------------------------------
# Fused kernel, Path A: whole image(s) per grid step.
#   org_ref / enh_ref : (TB, C, H, W)  native dtype
#   pwt_ref           : (W, WP)   native dtype, ones (column-pool matrix)
#   phc_ref           : (HP, C*H) f32, ones (channel + row pool matrix)
#   e_ref             : (TB, HP, WP) f32
#   pd_sc             : (TB, HP, WP) f32 scratch (pooled diff)
def _lspa_whole_kernel(org_ref, enh_ref, pwt_ref, phc_ref, e_ref, pd_sc):
    tb, c, h, w = org_ref.shape
    hp, wp = e_ref.shape[1], e_ref.shape[2]
    ch = c * h
    scale = 1.0 / (c * POOL * POOL)

    # ---- Stage 1: AvgPool2d(4) of the channel-mean difference, on the MXU.
    # One merged native-dtype matmul per input does the column pool.
    pwt = pwt_ref[...]
    ow = jnp.dot(org_ref[...].reshape(tb * ch, w), pwt,
                 preferred_element_type=jnp.float32)          # (TB*C*H, WP) f32
    ew = jnp.dot(enh_ref[...].reshape(tb * ch, w), pwt,
                 preferred_element_type=jnp.float32)
    dw = ow - ew                                               # folded org-enh
    phc = phc_ref[...]                                         # (HP, C*H) f32
    for i in range(tb):                                        # static unroll, TB <= 16
        pd_sc[i] = jnp.dot(phc, dw[i * ch:(i + 1) * ch, :],
                           preferred_element_type=jnp.float32) * scale

    # ---- Stage 2 (fused): zero-padded 4-neighbour squared diffs.
    row = jax.lax.broadcasted_iota(jnp.int32, (hp, wp), 0)     # masks hoisted once
    col = jax.lax.broadcasted_iota(jnp.int32, (hp, wp), 1)
    m_l = col == 0
    m_r = col == wp - 1
    m_u = row == 0
    m_d = row == hp - 1
    for i in range(tb):
        d = pd_sc[i]
        left = jnp.where(m_l, 0.0, pltpu.roll(d, shift=1, axis=1))
        right = jnp.where(m_r, 0.0, pltpu.roll(d, shift=wp - 1, axis=1))
        up = jnp.where(m_u, 0.0, pltpu.roll(d, shift=1, axis=0))
        down = jnp.where(m_d, 0.0, pltpu.roll(d, shift=hp - 1, axis=0))
        dl = d - left
        dr = d - right
        du = d - up
        dd = d - down
        e_ref[i] = dl * dl + dr * dr + du * du + dd * dd


# --------------------------------------------------------------------------
# Fused kernel, Path B: row-tiled (large images, VMEM-safe on v7x).
#   org_ref / enh_ref : (1, C, TH, W) native dtype     (TH % 32 == 0 preferred)
#   pwt_ref           : (W, WP)    native dtype, ones
#   phc_ref           : (THP, C*TH) f32, ones
#   e_ref             : (1, HP, WP) f32 -- resident across the row-tile axis
#   pd_sc             : (HP, WP) f32 persistent scratch (pooled diff)
def _lspa_rowtile_kernel(org_ref, enh_ref, pwt_ref, phc_ref, e_ref, pd_sc):
    _, c, th, w = org_ref.shape
    hp, wp = e_ref.shape[1], e_ref.shape[2]
    thp = phc_ref.shape[0]
    scale = 1.0 / (c * POOL * POOL)

    pwt = pwt_ref[...]
    ow = jnp.dot(org_ref[...].reshape(c * th, w), pwt,
                 preferred_element_type=jnp.float32)           # (C*TH, WP) f32
    ew = jnp.dot(enh_ref[...].reshape(c * th, w), pwt,
                 preferred_element_type=jnp.float32)
    p = jnp.dot(phc_ref[...], ow - ew,
                preferred_element_type=jnp.float32) * scale    # (THP, WP) f32

    ri = pl.program_id(1)
    start = pl.multiple_of(ri * thp, thp)
    pd_sc[pl.ds(start, thp), :] = p

    @pl.when(ri == pl.num_programs(1) - 1)
    def _():
        d = pd_sc[...]
        row = jax.lax.broadcasted_iota(jnp.int32, (hp, wp), 0)
        col = jax.lax.broadcasted_iota(jnp.int32, (hp, wp), 1)
        left = jnp.where(col == 0, 0.0, pltpu.roll(d, shift=1, axis=1))
        right = jnp.where(col == wp - 1, 0.0, pltpu.roll(d, shift=wp - 1, axis=1))
        up = jnp.where(row == 0, 0.0, pltpu.roll(d, shift=1, axis=0))
        down = jnp.where(row == hp - 1, 0.0, pltpu.roll(d, shift=hp - 1, axis=0))
        dl = d - left
        dr = d - right
        du = d - up
        dd = d - down
        e_ref[0] = dl * dl + dr * dr + du * du + dd * dd


# --------------------------------------------------------------------------
# Wrapper helpers.
def _chip_info():
    """(physical VMEM bytes, #TensorCores sharing the 'parallel' grid axes)."""
    vmem = 64 * _MiB                      # safe fallback for every generation
    cores = 1
    try:
        info = pltpu.get_tpu_info()
        vmem = int(getattr(info, "vmem_capacity_bytes", vmem))
    except Exception:
        pass
    try:
        kind = jax.devices()[0].device_kind.lower()
    except Exception:
        kind = ""
    if "v4" in kind or "v7" in kind:      # megacore / dual-TC parts
        cores = 2
    return vmem, cores


def _pick_tb(b, cap, fits):
    """Largest batch tile <= cap that fits; prefer exact divisors of b."""
    best_div, best_any = 1, 1
    for t in range(min(b, cap), 0, -1):
        if fits(t):
            best_any = t
            break
    for t in range(min(b, cap), 0, -1):
        if b % t == 0 and fits(t):
            best_div = t
            break
    return best_div if best_div * 2 >= best_any else best_any


def l_spa(org, enhance, *, vmem_budget_bytes=None, max_batch_block=16):
    """Pallas TPU implementation of L_spa.forward (returns E, shape (B,1,H/4,W/4))."""
    assert org.shape == enhance.shape, (org.shape, enhance.shape)
    b, c, h, w = org.shape
    assert h % POOL == 0 and w % POOL == 0, "H and W must be multiples of 4"
    hp, wp = h // POOL, w // POOL

    if not jnp.issubdtype(org.dtype, jnp.floating):
        # TODO(synk): integer inputs take the f32 cast path (v7x MXU has no int8).
        org = org.astype(jnp.float32)
        enhance = enhance.astype(jnp.float32)
    if enhance.dtype != org.dtype:
        enhance = enhance.astype(org.dtype)
    in_dtype = org.dtype
    isz = org.dtype.itemsize

    phys_vmem, n_cores = _chip_info()
    if vmem_budget_bytes is None:
        vmem_budget_bytes = int(0.70 * phys_vmem)      # ~45 MiB (v7x) / ~89 MiB (v5e/v6e)
    vmem_cap = phys_vmem - 8 * _MiB                    # never request > physical

    # Column-pool matrix (native dtype, ones -> exact in bf16).
    pwt = jnp.kron(jnp.eye(wp, dtype=jnp.float32),
                   jnp.ones((POOL, 1), jnp.float32)).astype(in_dtype)     # (W, WP)

    def fp_whole(tb):
        blk = tb * c * h * w * isz
        return (4 * blk                                # org+enh, double-buffered
                + 2 * blk                              # in-kernel operand copies (worst case)
                + 3 * tb * c * h * wp * 4              # ow / ew / dw f32
                + 11 * tb * hp * wp * 4                # out (x2) + scratch + stage-2 temps
                + 2 * (w * wp * isz + hp * c * h * 4))

    cap = min(b, max_batch_block)
    if n_cores >= 2 and b >= 2:
        cap = min(cap, max(1, (b + 1) // 2))           # keep >=2 steps on the parallel axis

    row_tiles = [t for t in range(32, h, 32) if h % t == 0]
    if not row_tiles:
        row_tiles = [t for t in range(8, h, 8) if h % t == 0]
    use_whole = fp_whole(1) <= vmem_budget_bytes or not row_tiles

    if use_whole:
        # -------- Path A: whole image(s) per grid step, stage 2 fused.
        tb = _pick_tb(b, cap, lambda t: fp_whole(t) <= vmem_budget_bytes)
        phc = jnp.tile(jnp.kron(jnp.eye(hp, dtype=jnp.float32),
                                jnp.ones((1, POOL), jnp.float32)), (1, c))  # (HP, C*H) f32
        vmem1 = int(min(max(fp_whole(tb) + 8 * _MiB, 32 * _MiB), vmem_cap))
        e = pl.pallas_call(
            _lspa_whole_kernel,
            out_shape=jax.ShapeDtypeStruct((b, hp, wp), jnp.float32),
            grid=(pl.cdiv(b, tb),),
            in_specs=[
                pl.BlockSpec((tb, c, h, w), lambda i: (i, 0, 0, 0)),
                pl.BlockSpec((tb, c, h, w), lambda i: (i, 0, 0, 0)),
                pl.BlockSpec((w, wp), lambda i: (0, 0)),
                pl.BlockSpec((hp, c * h), lambda i: (0, 0)),
            ],
            out_specs=pl.BlockSpec((tb, hp, wp), lambda i: (i, 0, 0)),
            scratch_shapes=[pltpu.VMEM((tb, hp, wp), jnp.float32)],
            compiler_params=pltpu.CompilerParams(
                dimension_semantics=("parallel",),
                vmem_limit_bytes=vmem1),
        )(org, enhance, pwt, phc)
    else:
        # -------- Path B: row-tiled; pooled diff lives in a persistent VMEM
        # scratch, E is produced under pl.when on the last row tile.
        def fp_tile(t):
            blk = c * t * w * isz
            return (4 * blk + 2 * blk
                    + 3 * c * t * wp * 4
                    + 11 * hp * wp * 4
                    + 2 * (w * wp * isz + (t // POOL) * c * t * 4))

        th = None
        for t in sorted(row_tiles, reverse=True):
            if fp_tile(t) <= vmem_budget_bytes:
                th = t
                break
        if th is None:
            th = row_tiles[0]
        thp = th // POOL
        phc = jnp.tile(jnp.kron(jnp.eye(thp, dtype=jnp.float32),
                                jnp.ones((1, POOL), jnp.float32)), (1, c))  # (THP, C*TH)
        vmem1 = int(min(max(fp_tile(th) + 8 * _MiB, 32 * _MiB), vmem_cap))
        e = pl.pallas_call(
            _lspa_rowtile_kernel,
            out_shape=jax.ShapeDtypeStruct((b, hp, wp), jnp.float32),
            grid=(b, h // th),
            in_specs=[
                pl.BlockSpec((1, c, th, w), lambda i, j: (i, 0, j, 0)),
                pl.BlockSpec((1, c, th, w), lambda i, j: (i, 0, j, 0)),
                pl.BlockSpec((w, wp), lambda i, j: (0, 0)),
                pl.BlockSpec((thp, c * th), lambda i, j: (0, 0)),
            ],
            out_specs=pl.BlockSpec((1, hp, wp), lambda i, j: (i, 0, 0)),
            scratch_shapes=[pltpu.VMEM((hp, wp), jnp.float32)],
            compiler_params=pltpu.CompilerParams(
                dimension_semantics=("parallel", "arbitrary"),
                vmem_limit_bytes=vmem1),
        )(org, enhance, pwt, phc)

    # Lane-dense flat stores were considered but skipped: the E output is tiny
    # relative to the stage-1 input DMA, and the in-kernel flatten would cost a
    # relayout of its own.
    return e.reshape(b, 1, hp, wp)


# --------------------------------------------------------------------------
# Plain-JAX reference mirroring the PyTorch forward, for verification.
def l_spa_ref(org, enhance):
    om = jnp.mean(org, axis=1, keepdims=True)
    em = jnp.mean(enhance, axis=1, keepdims=True)

    def pool(x):
        bb, _, hh, ww = x.shape
        return x.reshape(bb, 1, hh // POOL, POOL, ww // POOL, POOL).mean(axis=(3, 5))

    op, ep = pool(om), pool(em)

    def neigh(p):
        zc = jnp.zeros_like(p[..., :, :1])
        zr = jnp.zeros_like(p[..., :1, :])
        left = jnp.concatenate([zc, p[..., :, :-1]], axis=-1)
        right = jnp.concatenate([p[..., :, 1:], zc], axis=-1)
        up = jnp.concatenate([zr, p[..., :-1, :]], axis=-2)
        down = jnp.concatenate([p[..., 1:, :], zr], axis=-2)
        return left, right, up, down

    ol, orr, ou, od = neigh(op)
    el, err, eu, ed = neigh(ep)
    dl = (op - ol) - (ep - el)
    dr = (op - orr) - (ep - err)
    du = (op - ou) - (ep - eu)
    dd = (op - od) - (ep - ed)
    return dl * dl + dr * dr + du * du + dd * dd


if __name__ == "__main__":
    key = jax.random.PRNGKey(0)
    k1, k2 = jax.random.split(key)
    org = jax.random.uniform(k1, (2, 4, 16, 16), dtype=jnp.float32)
    enhance = jax.random.uniform(k2, (2, 4, 16, 16), dtype=jnp.float32)

    # f32 inputs.
    out = jax.block_until_ready(l_spa(org, enhance))
    ref = l_spa_ref(org, enhance)
    assert out.shape == (2, 1, 4, 4), out.shape
    np.testing.assert_allclose(np.asarray(out), np.asarray(ref),
                               rtol=1e-4, atol=1e-5)

    # Native bf16 inputs (no wrapper cast; the MXU consumes bf16 directly).
    org_b = org.astype(jnp.bfloat16)
    enh_b = enhance.astype(jnp.bfloat16)
    out_b = jax.block_until_ready(l_spa(org_b, enh_b))
    ref_b = l_spa_ref(org_b.astype(jnp.float32), enh_b.astype(jnp.float32))
    np.testing.assert_allclose(np.asarray(out_b), np.asarray(ref_b),
                               rtol=1e-3, atol=1e-5)

    print("KERNEL_OK")
</pallas_src>

<mosaic_0001>
module attributes {stable_mosaic.version = 11 : i64} {
  func.func @_lspa_whole_kernel(%arg0: i32, %arg1: memref<2x4x16x16xf32, #tpu.memory_space<vmem>>, %arg2: memref<2x4x16x16xf32, #tpu.memory_space<vmem>>, %arg3: memref<16x4xf32, #tpu.memory_space<vmem>>, %arg4: memref<4x64xf32, #tpu.memory_space<vmem>>, %arg5: memref<2x4x4xf32, #tpu.memory_space<vmem>>, %arg6: memref<2x4x4xf32, #tpu.memory_space<vmem>>) attributes {dimension_semantics = [#tpu.dimension_semantics<parallel>], iteration_bounds = array<i64: 1>, scalar_prefetch = 0 : i64, scratch_operands = 1 : i64, tpu.core_type = #tpu.core_type<tc>, window_params = [{transform_indices = @transform_0, window_bounds = array<i64: 2, 4, 16, 16>}, {transform_indices = @transform_1, window_bounds = array<i64: 2, 4, 16, 16>}, {pipeline_mode = #tpu.pipeline_mode<synchronous>, transform_indices = @transform_2, window_bounds = array<i64: 16, 4>}, {pipeline_mode = #tpu.pipeline_mode<synchronous>, transform_indices = @transform_3, window_bounds = array<i64: 4, 64>}, {transform_indices = @transform_4, window_bounds = array<i64: 2, 4, 4>}]} {
    %c0 = arith.constant 0 : index
    %c0_0 = arith.constant 0 : index
    %0 = vector.load %arg3[%c0, %c0_0] : memref<16x4xf32, #tpu.memory_space<vmem>>, vector<16x4xf32>
    %c0_1 = arith.constant 0 : index
    %c0_2 = arith.constant 0 : index
    %c0_3 = arith.constant 0 : index
    %c0_4 = arith.constant 0 : index
    %1 = vector.load %arg1[%c0_1, %c0_2, %c0_3, %c0_4] : memref<2x4x16x16xf32, #tpu.memory_space<vmem>>, vector<2x4x16x16xf32>
    %2 = vector.shape_cast %1 : vector<2x4x16x16xf32> to vector<128x16xf32>
    %cst = arith.constant dense<0.000000e+00> : vector<128x4xf32>
    %3 = tpu.matmul %2, %0, %cst {dimension_numbers = #tpu.dot_dimension_numbers<[1], [0], [0], [1], [0, 0, 1, 1], [], []>} : vector<128x16xf32>, vector<16x4xf32>, vector<128x4xf32> -> vector<128x4xf32>
    %c0_5 = arith.constant 0 : index
    %c0_6 = arith.constant 0 : index
    %c0_7 = arith.constant 0 : index
    %c0_8 = arith.constant 0 : index
    %4 = vector.load %arg2[%c0_5, %c0_6, %c0_7, %c0_8] : memref<2x4x16x16xf32, #tpu.memory_space<vmem>>, vector<2x4x16x16xf32>
    %5 = vector.shape_cast %4 : vector<2x4x16x16xf32> to vector<128x16xf32>
    %cst_9 = arith.constant dense<0.000000e+00> : vector<128x4xf32>
    %6 = tpu.matmul %5, %0, %cst_9 {dimension_numbers = #tpu.dot_dimension_numbers<[1], [0], [0], [1], [0, 0, 1, 1], [], []>} : vector<128x16xf32>, vector<16x4xf32>, vector<128x4xf32> -> vector<128x4xf32>
    %7 = arith.subf %3, %6 : vector<128x4xf32>
    %c0_10 = arith.constant 0 : index
    %c0_11 = arith.constant 0 : index
    %8 = vector.load %arg4[%c0_10, %c0_11] : memref<4x64xf32, #tpu.memory_space<vmem>>, vector<4x64xf32>
    %9 = vector.extract_strided_slice %7 {offsets = [0, 0], sizes = [64, 4], strides = [1, 1]} : vector<128x4xf32> to vector<64x4xf32>
    %cst_12 = arith.constant dense<0.000000e+00> : vector<4x4xf32>
    %10 = tpu.matmul %8, %9, %cst_12 {dimension_numbers = #tpu.dot_dimension_numbers<[1], [0], [0], [1], [0, 0, 1, 1], [], []>} : vector<4x64xf32>, vector<64x4xf32>, vector<4x4xf32> -> vector<4x4xf32>
    %cst_13 = arith.constant 1.562500e-02 : f32
    %11 = vector.broadcast %cst_13 : f32 to vector<4x4xf32>
    %12 = arith.mulf %10, %11 : vector<4x4xf32>
    %c0_14 = arith.constant 0 : index
    %c0_15 = arith.constant 0 : index
    %c0_16 = arith.constant 0 : index
    %13 = vector.load %arg6[%c0_14, %c0_15, %c0_16] : memref<2x4x4xf32, #tpu.memory_space<vmem>>, vector<1x4x4xf32>
    %14 = vector.shape_cast %13 : vector<1x4x4xf32> to vector<4x4xf32>
    %15 = vector.shape_cast %12 : vector<4x4xf32> to vector<1x4x4xf32>
    tpu.vector_store %arg6[%c0_14, %c0_15, %c0_16], %15 {strides = array<i32>} : memref<2x4x4xf32, #tpu.memory_space<vmem>>, vector<1x4x4xf32>,
    %16 = vector.extract_strided_slice %7 {offsets = [64, 0], sizes = [64, 4], strides = [1, 1]} : vector<128x4xf32> to vector<64x4xf32>
    %cst_17 = arith.constant dense<0.000000e+00> : vector<4x4xf32>
    %17 = tpu.matmul %8, %16, %cst_17 {dimension_numbers = #tpu.dot_dimension_numbers<[1], [0], [0], [1], [0, 0, 1, 1], [], []>} : vector<4x64xf32>, vector<64x4xf32>, vector<4x4xf32> -> vector<4x4xf32>
    %cst_18 = arith.constant 1.562500e-02 : f32
    %18 = vector.broadcast %cst_18 : f32 to vector<4x4xf32>
    %19 = arith.mulf %17, %18 : vector<4x4xf32>
    %c1 = arith.constant 1 : index
    %c0_19 = arith.constant 0 : index
    %c0_20 = arith.constant 0 : index
    %20 = vector.load %arg6[%c1, %c0_19, %c0_20] : memref<2x4x4xf32, #tpu.memory_space<vmem>>, vector<1x4x4xf32>
    %21 = vector.shape_cast %20 : vector<1x4x4xf32> to vector<4x4xf32>
    %22 = vector.shape_cast %19 : vector<4x4xf32> to vector<1x4x4xf32>
    tpu.vector_store %arg6[%c1, %c0_19, %c0_20], %22 {strides = array<i32>} : memref<2x4x4xf32, #tpu.memory_space<vmem>>, vector<1x4x4xf32>,
    %23 = tpu.iota {dimensions = array<i32: 0>} : vector<4x4xi32>
    %24 = tpu.iota {dimensions = array<i32: 1>} : vector<4x4xi32>
    %c0_i32 = arith.constant 0 : i32
    %25 = vector.broadcast %c0_i32 : i32 to vector<4x4xi32>
    %26 = arith.cmpi eq, %24, %25 : vector<4x4xi32>
    %c3_i32 = arith.constant 3 : i32
    %27 = vector.broadcast %c3_i32 : i32 to vector<4x4xi32>
    %28 = arith.cmpi eq, %24, %27 : vector<4x4xi32>
    %c0_i32_21 = arith.constant 0 : i32
    %29 = vector.broadcast %c0_i32_21 : i32 to vector<4x4xi32>
    %30 = arith.cmpi eq, %23, %29 : vector<4x4xi32>
    %c3_i32_22 = arith.constant 3 : i32
    %31 = vector.broadcast %c3_i32_22 : i32 to vector<4x4xi32>
    %32 = arith.cmpi eq, %23, %31 : vector<4x4xi32>
    %c0_23 = arith.constant 0 : index
    %c0_24 = arith.constant 0 : index
    %c0_25 = arith.constant 0 : index
    %33 = vector.load %arg6[%c0_23, %c0_24, %c0_25] : memref<2x4x4xf32, #tpu.memory_space<vmem>>, vector<1x4x4xf32>
    %34 = vector.shape_cast %33 : vector<1x4x4xf32> to vector<4x4xf32>
    %c1_i32 = arith.constant 1 : i32
    %35 = tpu.dynamic_rotate %34 by %c1_i32 dim 1 : vector<4x4xf32>, i32 -> vector<4x4xf32>
    %cst_26 = arith.constant 0.000000e+00 : f32
    %36 = vector.broadcast %cst_26 : f32 to vector<4x4xf32>
    %37 = arith.select %26, %36, %35 : vector<4x4xi1>, vector<4x4xf32>
    %c3_i32_27 = arith.constant 3 : i32
    %38 = tpu.dynamic_rotate %34 by %c3_i32_27 dim 1 : vector<4x4xf32>, i32 -> vector<4x4xf32>
    %cst_28 = arith.constant 0.000000e+00 : f32
    %39 = vector.broadcast %cst_28 : f32 to vector<4x4xf32>
    %40 = arith.select %28, %39, %38 : vector<4x4xi1>, vector<4x4xf32>
    %c1_i32_29 = arith.constant 1 : i32
    %41 = tpu.dynamic_rotate %34 by %c1_i32_29 dim 0 : vector<4x4xf32>, i32 -> vector<4x4xf32>
    %cst_30 = arith.constant 0.000000e+00 : f32
    %42 = vector.broadcast %cst_30 : f32 to vector<4x4xf32>
    %43 = arith.select %30, %42, %41 : vector<4x4xi1>, vector<4x4xf32>
    %c3_i32_31 = arith.constant 3 : i32
    %44 = tpu.dynamic_rotate %34 by %c3_i32_31 dim 0 : vector<4x4xf32>, i32 -> vector<4x4xf32>
    %cst_32 = arith.constant 0.000000e+00 : f32
    %45 = vector.broadcast %cst_32 : f32 to vector<4x4xf32>
    %46 = arith.select %32, %45, %44 : vector<4x4xi1>, vector<4x4xf32>
    %47 = arith.subf %34, %37 : vector<4x4xf32>
    %48 = arith.subf %34, %40 : vector<4x4xf32>
    %49 = arith.subf %34, %43 : vector<4x4xf32>
    %50 = arith.subf %34, %46 : vector<4x4xf32>
    %51 = arith.mulf %47, %47 : vector<4x4xf32>
    %52 = arith.mulf %48, %48 : vector<4x4xf32>
    %53 = arith.addf %51, %52 : vector<4x4xf32>
    %54 = arith.mulf %49, %49 : vector<4x4xf32>
    %55 = arith.addf %53, %54 : vector<4x4xf32>
    %56 = arith.mulf %50, %50 : vector<4x4xf32>
    %57 = arith.addf %55, %56 : vector<4x4xf32>
    %c0_33 = arith.constant 0 : index
    %c0_34 = arith.constant 0 : index
    %c0_35 = arith.constant 0 : index
    %58 = vector.load %arg5[%c0_33, %c0_34, %c0_35] : memref<2x4x4xf32, #tpu.memory_space<vmem>>, vector<1x4x4xf32>
    %59 = vector.shape_cast %58 : vector<1x4x4xf32> to vector<4x4xf32>
    %60 = vector.shape_cast %57 : vector<4x4xf32> to vector<1x4x4xf32>
    tpu.vector_store %arg5[%c0_33, %c0_34, %c0_35], %60 {strides = array<i32>} : memref<2x4x4xf32, #tpu.memory_space<vmem>>, vector<1x4x4xf32>,
    %c1_36 = arith.constant 1 : index
    %c0_37 = arith.constant 0 : index
    %c0_38 = arith.constant 0 : index
    %61 = vector.load %arg6[%c1_36, %c0_37, %c0_38] : memref<2x4x4xf32, #tpu.memory_space<vmem>>, vector<1x4x4xf32>
    %62 = vector.shape_cast %61 : vector<1x4x4xf32> to vector<4x4xf32>
    %c1_i32_39 = arith.constant 1 : i32
    %63 = tpu.dynamic_rotate %62 by %c1_i32_39 dim 1 : vector<4x4xf32>, i32 -> vector<4x4xf32>
    %cst_40 = arith.constant 0.000000e+00 : f32
    %64 = vector.broadcast %cst_40 : f32 to vector<4x4xf32>
    %65 = arith.select %26, %64, %63 : vector<4x4xi1>, vector<4x4xf32>
    %c3_i32_41 = arith.constant 3 : i32
    %66 = tpu.dynamic_rotate %62 by %c3_i32_41 dim 1 : vector<4x4xf32>, i32 -> vector<4x4xf32>
    %cst_42 = arith.constant 0.000000e+00 : f32
    %67 = vector.broadcast %cst_42 : f32 to vector<4x4xf32>
    %68 = arith.select %28, %67, %66 : vector<4x4xi1>, vector<4x4xf32>
    %c1_i32_43 = arith.constant 1 : i32
    %69 = tpu.dynamic_rotate %62 by %c1_i32_43 dim 0 : vector<4x4xf32>, i32 -> vector<4x4xf32>
    %cst_44 = arith.constant 0.000000e+00 : f32
    %70 = vector.broadcast %cst_44 : f32 to vector<4x4xf32>
    %71 = arith.select %30, %70, %69 : vector<4x4xi1>, vector<4x4xf32>
    %c3_i32_45 = arith.constant 3 : i32
    %72 = tpu.dynamic_rotate %62 by %c3_i32_45 dim 0 : vector<4x4xf32>, i32 -> vector<4x4xf32>
    %cst_46 = arith.constant 0.000000e+00 : f32
    %73 = vector.broadcast %cst_46 : f32 to vector<4x4xf32>
    %74 = arith.select %32, %73, %72 : vector<4x4xi1>, vector<4x4xf32>
    %75 = arith.subf %62, %65 : vector<4x4xf32>
    %76 = arith.subf %62, %68 : vector<4x4xf32>
    %77 = arith.subf %62, %71 : vector<4x4xf32>
    %78 = arith.subf %62, %74 : vector<4x4xf32>
    %79 = arith.mulf %75, %75 : vector<4x4xf32>
    %80 = arith.mulf %76, %76 : vector<4x4xf32>
    %81 = arith.addf %79, %80 : vector<4x4xf32>
    %82 = arith.mulf %77, %77 : vector<4x4xf32>
    %83 = arith.addf %81, %82 : vector<4x4xf32>
    %84 = arith.mulf %78, %78 : vector<4x4xf32>
    %85 = arith.addf %83, %84 : vector<4x4xf32>
    %c1_47 = arith.constant 1 : index
    %c0_48 = arith.constant 0 : index
    %c0_49 = arith.constant 0 : index
    %86 = vector.load %arg5[%c1_47, %c0_48, %c0_49] : memref<2x4x4xf32, #tpu.memory_space<vmem>>, vector<1x4x4xf32>
    %87 = vector.shape_cast %86 : vector<1x4x4xf32> to vector<4x4xf32>
    %88 = vector.shape_cast %85 : vector<4x4xf32> to vector<1x4x4xf32>
    tpu.vector_store %arg5[%c1_47, %c0_48, %c0_49], %88 {strides = array<i32>} : memref<2x4x4xf32, #tpu.memory_space<vmem>>, vector<1x4x4xf32>,
    return
  }
  func.func @transform_0(%arg0: i32) -> (i32, i32, i32, i32) {
    %c0_i32 = arith.constant 0 : i32
    %c0_i32_0 = arith.constant 0 : i32
    %c0_i32_1 = arith.constant 0 : i32
    %c0_i32_2 = arith.constant 0 : i32
    return %arg0, %c0_i32, %c0_i32_0, %c0_i32_1 : i32, i32, i32, i32
  }
  func.func @transform_1(%arg0: i32) -> (i32, i32, i32, i32) {
    %c0_i32 = arith.constant 0 : i32
    %c0_i32_0 = arith.constant 0 : i32
    %c0_i32_1 = arith.constant 0 : i32
    %c0_i32_2 = arith.constant 0 : i32
    return %arg0, %c0_i32, %c0_i32_0, %c0_i32_1 : i32, i32, i32, i32
  }
  func.func @transform_2(%arg0: i32) -> (i32, i32) {
    %c0_i32 = arith.constant 0 : i32
    %c0_i32_0 = arith.constant 0 : i32
    %c0_i32_1 = arith.constant 0 : i32
    return %c0_i32, %c0_i32_0 : i32, i32
  }
  func.func @transform_3(%arg0: i32) -> (i32, i32) {
    %c0_i32 = arith.constant 0 : i32
    %c0_i32_0 = arith.constant 0 : i32
    %c0_i32_1 = arith.constant 0 : i32
    return %c0_i32, %c0_i32_0 : i32, i32
  }
  func.func @transform_4(%arg0: i32) -> (i32, i32, i32) {
    %c0_i32 = arith.constant 0 : i32
    %c0_i32_0 = arith.constant 0 : i32
    %c0_i32_1 = arith.constant 0 : i32
    return %arg0, %c0_i32, %c0_i32_0 : i32, i32, i32
  }
}

</mosaic_0001>

<llo_original>
// kernel: tpu_custom_call.1
$region0: #{tpu_custom_call.1}
  #allocation0 [shape = 'u32[]', space=smem, size = 0x4, offset = 0x4, fixed_abs, tag = 'smem constant byte address 0x4 - core index']
  #allocation1 [shape = 'u32[144,128]{1,0:T(1,128)}', space=vmem, size = 0x12000, scoped, tag = 'internal scratch']
  #allocation2 [shape = 'f32[2,4,4]{2,1,0:T(4,128)}', space=vmem, size = 0x1000, scoped, tag = 'scratch operand']
  %s0 = inlined_call_operand.hbm [shape: f32[2,4,16,16], index: 0, kind: input, shape index: {}]
  %s1 = inlined_call_operand.hbm [shape: f32[2,4,16,16], index: 1, kind: input, shape index: {}]
  %s2 = inlined_call_operand.vmem [shape: f32[16,4], index: 2, kind: input, shape index: {}]
  %s3 = inlined_call_operand.vmem [shape: f32[4,64], index: 3, kind: input, shape index: {}]
  %s4 = inlined_call_operand.hbm [shape: f32[2,4,4], index: 4, kind: output, shape index: {}]
  %s5 = sld [smem:[#allocation0]]
  $region34: #{tpu_custom_call.1} parent=0
    _
  %s7 = ssub.s32 1, %s5
  %s8 = scalar_select 0, %s7, %s5
  $region1: #{tpu_custom_call.1} parent=0
    #allocation3 [shape = 'u8[65536]{0}', space=vmem, size = 0x10000, scoped, tag = 'input window, operand 0, single buffered']
    #allocation4 [shape = 's32[1]{0}', space=sflag, size = 0x4, scoped, tag = 'scoped memory for tpu_custom_call.1']
    #allocation5 [shape = 's32[1]{0}', space=sflag, size = 0x4, scoped, tag = 'scoped memory for tpu_custom_call.1']
    #allocation6 [shape = 'u8[65536]{0}', space=vmem, size = 0x10000, scoped, tag = 'input window, operand 1, single buffered']
    #allocation7 [shape = 's32[1]{0}', space=sflag, size = 0x4, scoped, tag = 'scoped memory for tpu_custom_call.1']
    #allocation8 [shape = 'u8[4096]{0}', space=vmem, size = 0x1000, scoped, tag = 'output window, operand 0, single buffered']
    %9 = vsyncpa [#allocation4], 0
    %10 = vsyncpa [#allocation7], 0
    %11 = vsyncpa [#allocation5], 0
    // Predicated region
    $region2: #{tpu_custom_call.1} parent=1 // pred_check
      _
    $region3: #{tpu_custom_call.1} parent=1 // pred_check_branch
      %13 = sbr.rel (0) target = $region5
    $region4: #{tpu_custom_call.1} parent=1 // pred_region
      %s15 = ssub.s32 2048, 2048
      %16 = vsyncadd [#allocation4], %s15
      %s17 = sshll.u32 [#allocation3], 4
      %s18 = int_to_ptr.vmem [resolvable:$true] %s17
      %23 = dma.hbm_to_vmem [thread:$0]  %s0, 2048, %s18, [#allocation4], 128, 128, 8
    $region5: #{tpu_custom_call.1} parent=1 // pred_fallthru
      _
    // Predicated region
    $region6: #{tpu_custom_call.1} parent=1 // pred_check
      _
    $region7: #{tpu_custom_call.1} parent=1 // pred_check_branch
      %25 = sbr.rel (0) target = $region9
    $region8: #{tpu_custom_call.1} parent=1 // pred_region
      %s27 = ssub.s32 2048, 2048
      %28 = vsyncadd [#allocation7], %s27
      %s29 = sshll.u32 [#allocation6], 4
      %s30 = int_to_ptr.vmem [resolvable:$true] %s29
      %35 = dma.hbm_to_vmem [thread:$0]  %s1, 2048, %s30, [#allocation7], 128, 128, 8
    $region9: #{tpu_custom_call.1} parent=1 // pred_fallthru
      _
    // Predicated region
    $region10: #{tpu_custom_call.1} parent=1 // pred_check
      _
    $region11: #{tpu_custom_call.1} parent=1 // pred_check_branch
      %37 = sbr.rel (0) target = $region13
    $region12: #{tpu_custom_call.1} parent=1 // pred_region
      _
    $region13: #{tpu_custom_call.1} parent=1 // pred_fallthru
      _
    // Predicated region
    $region14: #{tpu_custom_call.1} parent=1 // pred_check
      _
    $region15: #{tpu_custom_call.1} parent=1 // pred_check_branch
      %39 = sbr.rel (0) target = $region17
    $region16: #{tpu_custom_call.1} parent=1 // pred_region
      _
    $region17: #{tpu_custom_call.1} parent=1 // pred_fallthru
      _
    // Predicated region
    $region18: #{tpu_custom_call.1} parent=1 // pred_check
      _
    $region19: #{tpu_custom_call.1} parent=1 // pred_check_branch
      %41 = sbr.rel (0) target = $region21
    $region20: #{tpu_custom_call.1} parent=1 // pred_region
      %42 = dma.done [#allocation4], 2048
    $region21: #{tpu_custom_call.1} parent=1 // pred_fallthru
      _
    // Predicated region
    $region22: #{tpu_custom_call.1} parent=1 // pred_check
      _
    $region23: #{tpu_custom_call.1} parent=1 // pred_check_branch
      %44 = sbr.rel (0) target = $region25
    $region24: #{tpu_custom_call.1} parent=1 // pred_region
      %45 = dma.done [#allocation7], 2048
    $region25: #{tpu_custom_call.1} parent=1 // pred_fallthru
      _
    %v46 = vld [vmem:[%s2] sm:$0xff]
    %v47 = vld [vmem:[%s2 + $0x8] sm:$0xff]
    %v48 = vld [vmem:[#allocation3] sm:$0xff]
    %v49 = vld [vmem:[#allocation3 + $0x8] sm:$0xff]
    %v50 = vld [vmem:[#allocation3 + $0x10] sm:$0xff]
    %v51 = vld [vmem:[#allocation3 + $0x18] sm:$0xff]
    %v52 = vld [vmem:[#allocation3 + $0x20] sm:$0xff]
    %v53 = vld [vmem:[#allocation3 + $0x28] sm:$0xff]
    %v54 = vld [vmem:[#allocation3 + $0x30] sm:$0xff]
    %v55 = vld [vmem:[#allocation3 + $0x38] sm:$0xff]
    %v56 = vld [vmem:[#allocation3 + $0x40] sm:$0xff]
    %v57 = vld [vmem:[#allocation3 + $0x48] sm:$0xff]
    %v58 = vld [vmem:[#allocation3 + $0x50] sm:$0xff]
    %v59 = vld [vmem:[#allocation3 + $0x58] sm:$0xff]
    %v60 = vld [vmem:[#allocation3 + $0x60] sm:$0xff]
    %v61 = vld [vmem:[#allocation3 + $0x68] sm:$0xff]
    %v62 = vld [vmem:[#allocation3 + $0x70] sm:$0xff]
    %v63 = vld [vmem:[#allocation3 + $0x78] sm:$0xff]
    %vm64 = vcmask 130048
    %v66 = vsel %vm64, %v48, 0
    %v69 = vsel %vm64, %v49, 0
    %v72 = vsel %vm64, %v50, 0
    %v75 = vsel %vm64, %v51, 0
    %v78 = vsel %vm64, %v52, 0
    %v81 = vsel %vm64, %v53, 0
    %v84 = vsel %vm64, %v54, 0
    %v87 = vsel %vm64, %v55, 0
    %v90 = vsel %vm64, %v56, 0
    %v93 = vsel %vm64, %v57, 0
    %v96 = vsel %vm64, %v58, 0
    %v99 = vsel %vm64, %v59, 0
    %v102 = vsel %vm64, %v60, 0
    %v105 = vsel %vm64, %v61, 0
    %v108 = vsel %vm64, %v62, 0
    %v111 = vsel %vm64, %v63, 0
    %113 = vmatprep.subr.mxu0 0.0
    %114 = vmatpush1.msra.mxu0 0.0
    %115 = vmatprep.subr.mxu0 0.0
    %116 = vmatpush1.msra.mxu0 0.0
    %117 = vmatprep.subr.mxu0 0.0
    %118 = vmatpush1.msra.mxu0 0.0
    %119 = vmatprep.subr.mxu0 0.0
    %120 = vmatpush1.msra.mxu0 0.0
    %121 = vmatprep.subr.mxu0 0.0
    %122 = vmatpush1.msra.mxu0 0.0
    %123 = vmatprep.subr.mxu0 0.0
    %124 = vmatpush1.msra.mxu0 0.0
    %125 = vmatprep.subr.mxu0 0.0
    %126 = vmatpush1.msra.mxu0 0.0
    %127 = vmatprep.subr.mxu0 0.0
    %128 = vmatpush1.msra.mxu0 0.0
    %129 = vmatprep.subr.mxu0 0.0
    %130 = vmatpush1.msra.mxu0 0.0
    %131 = vmatprep.subr.mxu0 0.0
    %132 = vmatpush1.msra.mxu0 0.0
    %133 = vmatprep.subr.mxu0 0.0
    %134 = vmatpush1.msra.mxu0 0.0
    %135 = vmatprep.subr.mxu0 0.0
    %136 = vmatpush1.msra.mxu0 0.0
    %137 = vmatprep.subr.mxu0 0.0
    %138 = vmatpush1.msra.mxu0 0.0
    %139 = vmatprep.subr.mxu0 0.0
    %140 = vmatpush1.msra.mxu0 0.0
    %141 = vmatprep.subr.mxu0 0.0
    %142 = vmatpush1.msra.mxu0 %v47
    %143 = vmatprep.subr.mxu0 0.0
    %144 = vmatpush1.msra.mxu0 %v46
    %145 = vmatprep.subr.mxu0 0.0
    %146 = vmatpush2.msra.mxu0 0.0
    %147 = vmatprep.subr.mxu0 0.0
    %148 = vmatpush2.msra.mxu0 0.0
    %149 = vmatprep.subr.mxu0 0.0
    %150 = vmatpush2.msra.mxu0 0.0
    %151 = vmatprep.subr.mxu0 0.0
    %152 = vmatpush2.msra.mxu0 0.0
    %153 = vmatprep.subr.mxu0 0.0
    %154 = vmatpush2.msra.mxu0 0.0
    %155 = vmatprep.subr.mxu0 0.0
    %156 = vmatpush2.msra.mxu0 0.0
    %157 = vmatprep.subr.mxu0 0.0
    %158 = vmatpush2.msra.mxu0 0.0
    %159 = vmatprep.subr.mxu0 0.0
    %160 = vmatpush2.msra.mxu0 0.0
    %161 = vmatprep.subr.mxu0 0.0
    %162 = vmatpush2.msra.mxu0 0.0
    %163 = vmatprep.subr.mxu0 0.0
    %164 = vmatpush2.msra.mxu0 0.0
    %165 = vmatprep.subr.mxu0 0.0
    %166 = vmatpush2.msra.mxu0 0.0
    %167 = vmatprep.subr.mxu0 0.0
    %168 = vmatpush2.msra.mxu0 0.0
    %169 = vmatprep.subr.mxu0 0.0
    %170 = vmatpush2.msra.mxu0 0.0
    %171 = vmatprep.subr.mxu0 0.0
    %172 = vmatpush2.msra.mxu0 0.0
    %173 = vmatprep.subr.mxu0 0.0
    %174 = vmatpush2.msra.mxu0 0.0
    %175 = vmatprep.subr.mxu0 0.0
    %176 = vmatpush2.msra.mxu0 0.0
    %177 = vmatprep.mubr.f32.mxu0 0.0
    %178 = vmatmul.mubr.f32.gmra.mxu0 %v66
    %v179 = vpop.f32.mrf.mxu0
    %v180 = vadd.f32 0.0, %v179
    %v181 = vpop.f32.mrf.mxu0
    %182 = vmatprep.mubr.f32.mxu0 0.0
    %183 = vmatmul.mubr.f32.gmra.mxu0 %v69
    %v184 = vpop.f32.mrf.mxu0
    %v185 = vadd.f32 0.0, %v184
    %v186 = vpop.f32.mrf.mxu0
    %187 = vmatprep.mubr.f32.mxu0 0.0
    %188 = vmatmul.mubr.f32.gmra.mxu0 %v72
    %v189 = vpop.f32.mrf.mxu0
    %v190 = vadd.f32 0.0, %v189
    %v191 = vpop.f32.mrf.mxu0
    %192 = vmatprep.mubr.f32.mxu0 0.0
    %193 = vmatmul.mubr.f32.gmra.mxu0 %v75
    %v194 = vpop.f32.mrf.mxu0
    %v195 = vadd.f32 0.0, %v194
    %v196 = vpop.f32.mrf.mxu0
    %197 = vmatprep.mubr.f32.mxu0 0.0
    %198 = vmatmul.mubr.f32.gmra.mxu0 %v78
    %v199 = vpop.f32.mrf.mxu0
    %v200 = vadd.f32 0.0, %v199
    %v201 = vpop.f32.mrf.mxu0
    %202 = vmatprep.mubr.f32.mxu0 0.0
    %203 = vmatmul.mubr.f32.gmra.mxu0 %v81
    %v204 = vpop.f32.mrf.mxu0
    %v205 = vadd.f32 0.0, %v204
    %v206 = vpop.f32.mrf.mxu0
    %207 = vmatprep.mubr.f32.mxu0 0.0
    %208 = vmatmul.mubr.f32.gmra.mxu0 %v84
    %v209 = vpop.f32.mrf.mxu0
    %v210 = vadd.f32 0.0, %v209
    %v211 = vpop.f32.mrf.mxu0
    %212 = vmatprep.mubr.f32.mxu0 0.0
    %213 = vmatmul.mubr.f32.gmra.mxu0 %v87
    %v214 = vpop.f32.mrf.mxu0
    %v215 = vadd.f32 0.0, %v214
    %v216 = vpop.f32.mrf.mxu0
    %217 = vmatprep.mubr.f32.mxu0 0.0
    %218 = vmatmul.mubr.f32.gmra.mxu0 %v90
    %v219 = vpop.f32.mrf.mxu0
    %v220 = vadd.f32 0.0, %v219
    %v221 = vpop.f32.mrf.mxu0
    %222 = vmatprep.mubr.f32.mxu0 0.0
    %223 = vmatmul.mubr.f32.gmra.mxu0 %v93
    %v224 = vpop.f32.mrf.mxu0
    %v225 = vadd.f32 0.0, %v224
    %v226 = vpop.f32.mrf.mxu0
    %227 = vmatprep.mubr.f32.mxu0 0.0
    %228 = vmatmul.mubr.f32.gmra.mxu0 %v96
    %v229 = vpop.f32.mrf.mxu0
    %v230 = vadd.f32 0.0, %v229
    %v231 = vpop.f32.mrf.mxu0
    %232 = vmatprep.mubr.f32.mxu0 0.0
    %233 = vmatmul.mubr.f32.gmra.mxu0 %v99
    %v234 = vpop.f32.mrf.mxu0
    %v235 = vadd.f32 0.0, %v234
    %v236 = vpop.f32.mrf.mxu0
    %237 = vmatprep.mubr.f32.mxu0 0.0
    %238 = vmatmul.mubr.f32.gmra.mxu0 %v102
    %v239 = vpop.f32.mrf.mxu0
    %v240 = vadd.f32 0.0, %v239
    %v241 = vpop.f32.mrf.mxu0
    %242 = vmatprep.mubr.f32.mxu0 0.0
    %243 = vmatmul.mubr.f32.gmra.mxu0 %v105
    %v244 = vpop.f32.mrf.mxu0
    %v245 = vadd.f32 0.0, %v244
    %v246 = vpop.f32.mrf.mxu0
    %247 = vmatprep.mubr.f32.mxu0 0.0
    %248 = vmatmul.mubr.f32.gmra.mxu0 %v108
    %v249 = vpop.f32.mrf.mxu0
    %v250 = vadd.f32 0.0, %v249
    %v251 = vpop.f32.mrf.mxu0
    %252 = vmatprep.mubr.f32.mxu0 0.0
    %253 = vmatmul.mubr.f32.gmra.mxu0 %v111
    %v254 = vpop.f32.mrf.mxu0
    %v255 = vadd.f32 0.0, %v254
    %v256 = vpop.f32.mrf.mxu0
    %257 = vdwg.mxu0
    %v258 = vld [vmem:[#allocation6] sm:$0xff]
    %v259 = vld [vmem:[#allocation6 + $0x8] sm:$0xff]
    %v260 = vld [vmem:[#allocation6 + $0x10] sm:$0xff]
    %v261 = vld [vmem:[#allocation6 + $0x18] sm:$0xff]
    %v262 = vld [vmem:[#allocation6 + $0x20] sm:$0xff]
    %v263 = vld [vmem:[#allocation6 + $0x28] sm:$0xff]
    %v264 = vld [vmem:[#allocation6 + $0x30] sm:$0xff]
    %v265 = vld [vmem:[#allocation6 + $0x38] sm:$0xff]
    %v266 = vld [vmem:[#allocation6 + $0x40] sm:$0xff]
    %v267 = vld [vmem:[#allocation6 + $0x48] sm:$0xff]
    %v268 = vld [vmem:[#allocation6 + $0x50] sm:$0xff]
    %v269 = vld [vmem:[#allocation6 + $0x58] sm:$0xff]
    %v270 = vld [vmem:[#allocation6 + $0x60] sm:$0xff]
    %v271 = vld [vmem:[#allocation6 + $0x68] sm:$0xff]
    %v272 = vld [vmem:[#allocation6 + $0x70] sm:$0xff]
    %v273 = vld [vmem:[#allocation6 + $0x78] sm:$0xff]
    %v275 = vsel %vm64, %v258, 0
    %v278 = vsel %vm64, %v259, 0
    %v281 = vsel %vm64, %v260, 0
    %v284 = vsel %vm64, %v261, 0
    %v287 = vsel %vm64, %v262, 0
    %v290 = vsel %vm64, %v263, 0
    %v293 = vsel %vm64, %v264, 0
    %v296 = vsel %vm64, %v265, 0
    %v299 = vsel %vm64, %v266, 0
    %v302 = vsel %vm64, %v267, 0
    %v305 = vsel %vm64, %v268, 0
    %v308 = vsel %vm64, %v269, 0
    %v311 = vsel %vm64, %v270, 0
    %v314 = vsel %vm64, %v271, 0
    %v317 = vsel %vm64, %v272, 0
    %v320 = vsel %vm64, %v273, 0
    %322 = vmatprep.subr.mxu0 0.0
    %323 = vmatpush1.msra.mxu0 0.0
    %324 = vmatprep.subr.mxu0 0.0
    %325 = vmatpush1.msra.mxu0 0.0
    %326 = vmatprep.subr.mxu0 0.0
    %327 = vmatpush1.msra.mxu0 0.0
    %328 = vmatprep.subr.mxu0 0.0
    %329 = vmatpush1.msra.mxu0 0.0
    %330 = vmatprep.subr.mxu0 0.0
    %331 = vmatpush1.msra.mxu0 0.0
    %332 = vmatprep.subr.mxu0 0.0
    %333 = vmatpush1.msra.mxu0 0.0
    %334 = vmatprep.subr.mxu0 0.0
    %335 = vmatpush1.msra.mxu0 0.0
    %336 = vmatprep.subr.mxu0 0.0
    %337 = vmatpush1.msra.mxu0 0.0
    %338 = vmatprep.subr.mxu0 0.0
    %339 = vmatpush1.msra.mxu0 0.0
    %340 = vmatprep.subr.mxu0 0.0
    %341 = vmatpush1.msra.mxu0 0.0
    %342 = vmatprep.subr.mxu0 0.0
    %343 = vmatpush1.msra.mxu0 0.0
    %344 = vmatprep.subr.mxu0 0.0
    %345 = vmatpush1.msra.mxu0 0.0
    %346 = vmatprep.subr.mxu0 0.0
    %347 = vmatpush1.msra.mxu0 0.0
    %348 = vmatprep.subr.mxu0 0.0
    %349 = vmatpush1.msra.mxu0 0.0
    %350 = vmatprep.subr.mxu0 0.0
    %351 = vmatpush1.msra.mxu0 %v47
    %352 = vmatprep.subr.mxu0 0.0
    %353 = vmatpush1.msra.mxu0 %v46
    %354 = vmatprep.subr.mxu0 0.0
    %355 = vmatpush2.msra.mxu0 0.0
    %356 = vmatprep.subr.mxu0 0.0
    %357 = vmatpush2.msra.mxu0 0.0
    %358 = vmatprep.subr.mxu0 0.0
    %359 = vmatpush2.msra.mxu0 0.0
    %360 = vmatprep.subr.mxu0 0.0
    %361 = vmatpush2.msra.mxu0 0.0
    %362 = vmatprep.subr.mxu0 0.0
    %363 = vmatpush2.msra.mxu0 0.0
    %364 = vmatprep.subr.mxu0 0.0
    %365 = vmatpush2.msra.mxu0 0.0
    %366 = vmatprep.subr.mxu0 0.0
    %367 = vmatpush2.msra.mxu0 0.0
    %368 = vmatprep.subr.mxu0 0.0
    %369 = vmatpush2.msra.mxu0 0.0
    %370 = vmatprep.subr.mxu0 0.0
    %371 = vmatpush2.msra.mxu0 0.0
    %372 = vmatprep.subr.mxu0 0.0
    %373 = vmatpush2.msra.mxu0 0.0
    %374 = vmatprep.subr.mxu0 0.0
    %375 = vmatpush2.msra.mxu0 0.0
    %376 = vmatprep.subr.mxu0 0.0
    %377 = vmatpush2.msra.mxu0 0.0
    %378 = vmatprep.subr.mxu0 0.0
    %379 = vmatpush2.msra.mxu0 0.0
    %380 = vmatprep.subr.mxu0 0.0
    %381 = vmatpush2.msra.mxu0 0.0
    %382 = vmatprep.subr.mxu0 0.0
    %383 = vmatpush2.msra.mxu0 0.0
    %384 = vmatprep.subr.mxu0 0.0
    %385 = vmatpush2.msra.mxu0 0.0
    %386 = vmatprep.mubr.f32.mxu0 0.0
    %387 = vmatmul.mubr.f32.gmra.mxu0 %v275
    %v388 = vpop.f32.mrf.mxu0
    %v389 = vadd.f32 0.0, %v388
    %v390 = vpop.f32.mrf.mxu0
    %391 = vmatprep.mubr.f32.mxu0 0.0
    %392 = vmatmul.mubr.f32.gmra.mxu0 %v278
    %v393 = vpop.f32.mrf.mxu0
    %v394 = vadd.f32 0.0, %v393
    %v395 = vpop.f32.mrf.mxu0
    %396 = vmatprep.mubr.f32.mxu0 0.0
    %397 = vmatmul.mubr.f32.gmra.mxu0 %v281
    %v398 = vpop.f32.mrf.mxu0
    %v399 = vadd.f32 0.0, %v398
    %v400 = vpop.f32.mrf.mxu0
    %401 = vmatprep.mubr.f32.mxu0 0.0
    %402 = vmatmul.mubr.f32.gmra.mxu0 %v284
    %v403 = vpop.f32.mrf.mxu0
    %v404 = vadd.f32 0.0, %v403
    %v405 = vpop.f32.mrf.mxu0
    %406 = vmatprep.mubr.f32.mxu0 0.0
    %407 = vmatmul.mubr.f32.gmra.mxu0 %v287
    %v408 = vpop.f32.mrf.mxu0
    %v409 = vadd.f32 0.0, %v408
    %v410 = vpop.f32.mrf.mxu0
    %411 = vmatprep.mubr.f32.mxu0 0.0
    %412 = vmatmul.mubr.f32.gmra.mxu0 %v290
    %v413 = vpop.f32.mrf.mxu0
    %v414 = vadd.f32 0.0, %v413
    %v415 = vpop.f32.mrf.mxu0
    %416 = vmatprep.mubr.f32.mxu0 0.0
    %417 = vmatmul.mubr.f32.gmra.mxu0 %v293
    %v418 = vpop.f32.mrf.mxu0
    %v419 = vadd.f32 0.0, %v418
    %v420 = vpop.f32.mrf.mxu0
    %421 = vmatprep.mubr.f32.mxu0 0.0
    %422 = vmatmul.mubr.f32.gmra.mxu0 %v296
    %v423 = vpop.f32.mrf.mxu0
    %v424 = vadd.f32 0.0, %v423
    %v425 = vpop.f32.mrf.mxu0
    %426 = vmatprep.mubr.f32.mxu0 0.0
    %427 = vmatmul.mubr.f32.gmra.mxu0 %v299
    %v428 = vpop.f32.mrf.mxu0
    %v429 = vadd.f32 0.0, %v428
    %v430 = vpop.f32.mrf.mxu0
    %431 = vmatprep.mubr.f32.mxu0 0.0
    %432 = vmatmul.mubr.f32.gmra.mxu0 %v302
    %v433 = vpop.f32.mrf.mxu0
    %v434 = vadd.f32 0.0, %v433
    %v435 = vpop.f32.mrf.mxu0
    %436 = vmatprep.mubr.f32.mxu0 0.0
    %437 = vmatmul.mubr.f32.gmra.mxu0 %v305
    %v438 = vpop.f32.mrf.mxu0
    %v439 = vadd.f32 0.0, %v438
    %v440 = vpop.f32.mrf.mxu0
    %441 = vmatprep.mubr.f32.mxu0 0.0
    %442 = vmatmul.mubr.f32.gmra.mxu0 %v308
    %v443 = vpop.f32.mrf.mxu0
    %v444 = vadd.f32 0.0, %v443
    %v445 = vpop.f32.mrf.mxu0
    %446 = vmatprep.mubr.f32.mxu0 0.0
    %447 = vmatmul.mubr.f32.gmra.mxu0 %v311
    %v448 = vpop.f32.mrf.mxu0
    %v449 = vadd.f32 0.0, %v448
    %v450 = vpop.f32.mrf.mxu0
    %451 = vmatprep.mubr.f32.mxu0 0.0
    %452 = vmatmul.mubr.f32.gmra.mxu0 %v314
    %v453 = vpop.f32.mrf.mxu0
    %v454 = vadd.f32 0.0, %v453
    %v455 = vpop.f32.mrf.mxu0
    %456 = vmatprep.mubr.f32.mxu0 0.0
    %457 = vmatmul.mubr.f32.gmra.mxu0 %v317
    %v458 = vpop.f32.mrf.mxu0
    %v459 = vadd.f32 0.0, %v458
    %v460 = vpop.f32.mrf.mxu0
    %461 = vmatprep.mubr.f32.mxu0 0.0
    %462 = vmatmul.mubr.f32.gmra.mxu0 %v320
    %v463 = vpop.f32.mrf.mxu0
    %v464 = vadd.f32 0.0, %v463
    %v465 = vpop.f32.mrf.mxu0
    %466 = vdwg.mxu0
    %v467 = vsub.f32 %v180, %v389
    %v468 = vsub.f32 %v185, %v394
    %v469 = vsub.f32 %v190, %v399
    %v470 = vsub.f32 %v195, %v404
    %v471 = vsub.f32 %v200, %v409
    %v472 = vsub.f32 %v205, %v414
    %v473 = vsub.f32 %v210, %v419
    %v474 = vsub.f32 %v215, %v424
    %v475 = vsub.f32 %v220, %v429
    %v476 = vsub.f32 %v225, %v434
    %v477 = vsub.f32 %v230, %v439
    %v478 = vsub.f32 %v235, %v444
    %v479 = vsub.f32 %v240, %v449
    %v480 = vsub.f32 %v245, %v454
    %v481 = vsub.f32 %v250, %v459
    %v482 = vsub.f32 %v255, %v464
    %v483 = vld [vmem:[%s3] sm:$0xf]
    %vm484 = vcmask 523264
    %v486 = vsel %vm484, %v483, 0
    %488 = vmatprep.subr.mxu0 0.0
    %489 = vmatpush1.msra.mxu0 0.0
    %490 = vmatprep.subr.mxu0 0.0
    %491 = vmatpush1.msra.mxu0 0.0
    %492 = vmatprep.subr.mxu0 0.0
    %493 = vmatpush1.msra.mxu0 0.0
    %494 = vmatprep.subr.mxu0 0.0
    %495 = vmatpush1.msra.mxu0 0.0
    %496 = vmatprep.subr.mxu0 0.0
    %497 = vmatpush1.msra.mxu0 0.0
    %498 = vmatprep.subr.mxu0 0.0
    %499 = vmatpush1.msra.mxu0 0.0
    %500 = vmatprep.subr.mxu0 0.0
    %501 = vmatpush1.msra.mxu0 0.0
    %502 = vmatprep.subr.mxu0 0.0
    %503 = vmatpush1.msra.mxu0 0.0
    %504 = vmatprep.subr.mxu0 0.0
    %505 = vmatpush1.msra.mxu0 %v474
    %506 = vmatprep.subr.mxu0 0.0
    %507 = vmatpush1.msra.mxu0 %v473
    %508 = vmatprep.subr.mxu0 0.0
    %509 = vmatpush1.msra.mxu0 %v472
    %510 = vmatprep.subr.mxu0 0.0
    %511 = vmatpush1.msra.mxu0 %v471
    %512 = vmatprep.subr.mxu0 0.0
    %513 = vmatpush1.msra.mxu0 %v470
    %514 = vmatprep.subr.mxu0 0.0
    %515 = vmatpush1.msra.mxu0 %v469
    %516 = vmatprep.subr.mxu0 0.0
    %517 = vmatpush1.msra.mxu0 %v468
    %518 = vmatprep.subr.mxu0 0.0
    %519 = vmatpush1.msra.mxu0 %v467
    %520 = vmatprep.subr.mxu0 0.0
    %521 = vmatpush2.msra.mxu0 0.0
    %522 = vmatprep.subr.mxu0 0.0
    %523 = vmatpush2.msra.mxu0 0.0
    %524 = vmatprep.subr.mxu0 0.0
    %525 = vmatpush2.msra.mxu0 0.0
    %526 = vmatprep.subr.mxu0 0.0
    %527 = vmatpush2.msra.mxu0 0.0
    %528 = vmatprep.subr.mxu0 0.0
    %529 = vmatpush2.msra.mxu0 0.0
    %530 = vmatprep.subr.mxu0 0.0
    %531 = vmatpush2.msra.mxu0 0.0
    %532 = vmatprep.subr.mxu0 0.0
    %533 = vmatpush2.msra.mxu0 0.0
    %534 = vmatprep.subr.mxu0 0.0
    %535 = vmatpush2.msra.mxu0 0.0
    %536 = vmatprep.subr.mxu0 0.0
    %537 = vmatpush2.msra.mxu0 0.0
    %538 = vmatprep.subr.mxu0 0.0
    %539 = vmatpush2.msra.mxu0 0.0
    %540 = vmatprep.subr.mxu0 0.0
    %541 = vmatpush2.msra.mxu0 0.0
    %542 = vmatprep.subr.mxu0 0.0
    %543 = vmatpush2.msra.mxu0 0.0
    %544 = vmatprep.subr.mxu0 0.0
    %545 = vmatpush2.msra.mxu0 0.0
    %546 = vmatprep.subr.mxu0 0.0
    %547 = vmatpush2.msra.mxu0 0.0
    %548 = vmatprep.subr.mxu0 0.0
    %549 = vmatpush2.msra.mxu0 0.0
    %550 = vmatprep.subr.mxu0 0.0
    %551 = vmatpush2.msra.mxu0 0.0
    %552 = vmatprep.mubr.f32.mxu0 0.0
    %553 = vmatmul.mubr.f32.gmra.mxu0 %v486
    %v554 = vpop.f32.mrf.mxu0
    %v555 = vadd.f32 0.0, %v554
    %v556 = vpop.f32.mrf.mxu0
    %557 = vdwg.mxu0
    %v558 = vmul.f32 %v555, 0.015625
    %vm559 = vcmask 27648
    %560 = vst.msk [vmem:[#allocation2] sm:$0xf] %vm559, %v558
    %561 = vmatprep.subr.mxu0 0.0
    %562 = vmatpush1.msra.mxu0 0.0
    %563 = vmatprep.subr.mxu0 0.0
    %564 = vmatpush1.msra.mxu0 0.0
    %565 = vmatprep.subr.mxu0 0.0
    %566 = vmatpush1.msra.mxu0 0.0
    %567 = vmatprep.subr.mxu0 0.0
    %568 = vmatpush1.msra.mxu0 0.0
    %569 = vmatprep.subr.mxu0 0.0
    %570 = vmatpush1.msra.mxu0 0.0
    %571 = vmatprep.subr.mxu0 0.0
    %572 = vmatpush1.msra.mxu0 0.0
    %573 = vmatprep.subr.mxu0 0.0
    %574 = vmatpush1.msra.mxu0 0.0
    %575 = vmatprep.subr.mxu0 0.0
    %576 = vmatpush1.msra.mxu0 0.0
    %577 = vmatprep.subr.mxu0 0.0
    %578 = vmatpush1.msra.mxu0 %v482
    %579 = vmatprep.subr.mxu0 0.0
    %580 = vmatpush1.msra.mxu0 %v481
    %581 = vmatprep.subr.mxu0 0.0
    %582 = vmatpush1.msra.mxu0 %v480
    %583 = vmatprep.subr.mxu0 0.0
    %584 = vmatpush1.msra.mxu0 %v479
    %585 = vmatprep.subr.mxu0 0.0
    %586 = vmatpush1.msra.mxu0 %v478
    %587 = vmatprep.subr.mxu0 0.0
    %588 = vmatpush1.msra.mxu0 %v477
    %589 = vmatprep.subr.mxu0 0.0
    %590 = vmatpush1.msra.mxu0 %v476
    %591 = vmatprep.subr.mxu0 0.0
    %592 = vmatpush1.msra.mxu0 %v475
    %593 = vmatprep.subr.mxu0 0.0
    %594 = vmatpush2.msra.mxu0 0.0
    %595 = vmatprep.subr.mxu0 0.0
    %596 = vmatpush2.msra.mxu0 0.0
    %597 = vmatprep.subr.mxu0 0.0
    %598 = vmatpush2.msra.mxu0 0.0
    %599 = vmatprep.subr.mxu0 0.0
    %600 = vmatpush2.msra.mxu0 0.0
    %601 = vmatprep.subr.mxu0 0.0
    %602 = vmatpush2.msra.mxu0 0.0
    %603 = vmatprep.subr.mxu0 0.0
    %604 = vmatpush2.msra.mxu0 0.0
    %605 = vmatprep.subr.mxu0 0.0
    %606 = vmatpush2.msra.mxu0 0.0
    %607 = vmatprep.subr.mxu0 0.0
    %608 = vmatpush2.msra.mxu0 0.0
    %609 = vmatprep.subr.mxu0 0.0
    %610 = vmatpush2.msra.mxu0 0.0
    %611 = vmatprep.subr.mxu0 0.0
    %612 = vmatpush2.msra.mxu0 0.0
    %613 = vmatprep.subr.mxu0 0.0
    %614 = vmatpush2.msra.mxu0 0.0
    %615 = vmatprep.subr.mxu0 0.0
    %616 = vmatpush2.msra.mxu0 0.0
    %617 = vmatprep.subr.mxu0 0.0
    %618 = vmatpush2.msra.mxu0 0.0
    %619 = vmatprep.subr.mxu0 0.0
    %620 = vmatpush2.msra.mxu0 0.0
    %621 = vmatprep.subr.mxu0 0.0
    %622 = vmatpush2.msra.mxu0 0.0
    %623 = vmatprep.subr.mxu0 0.0
    %624 = vmatpush2.msra.mxu0 0.0
    %625 = vmatprep.mubr.f32.mxu0 0.0
    %626 = vmatmul.mubr.f32.gmra.mxu0 %v486
    %v627 = vpop.f32.mrf.mxu0
    %v628 = vadd.f32 0.0, %v627
    %v629 = vpop.f32.mrf.mxu0
    %630 = vdwg.mxu0
    %v631 = vmul.f32 %v628, 0.015625
    %s632 = scalar_lea.vmem [#allocation2], 4
    %633 = vst.msk [vmem:[%s632] sm:$0xf] %vm559, %v631
    %v634 = vlaneseq
    %v635 = vshrl.u32 %v634, 7
    %v636 = vlaneseq
    %v637 = vand.u32 %v636, 127
    %vm638 = vcmp.eq.s32.totalorder %v637, 0
    %vm639 = vcmp.eq.s32.totalorder %v637, 3
    %vm640 = vcmp.eq.s32.totalorder %v635, 0
    %vm641 = vcmp.eq.s32.totalorder %v635, 3
    %v642 = vld [vmem:[#allocation2] sm:$0xf]
    %vm643 = vcmask 1047584
    %644 = vrot.lane.b32.xlu0 %v642, 4
    %v645 = vpop.permute.xlu0 %644
    %v646 = vsel %vm643, %v645, %v642
    %647 = vrot.lane.b32.xlu0 %v646, 4
    %v648 = vpop.permute.xlu0 %647
    %v649 = vsel %vm643, %v648, %v642
    %651 = vrot.lane.b32.xlu0 %v649, 125
    %v652 = vpop.permute.xlu0 %651
    %v654 = vsel %vm638, 0.0, %v652
    %655 = vrot.lane.b32.xlu0 %v649, 127
    %v656 = vpop.permute.xlu0 %655
    %v658 = vsel %vm639, 0.0, %v656
    %vm659 = vcmask 1047556
    %v660 = vrot.slane %v642, 4
    %v661 = vsel %vm659, %v660, %v642
    %v662 = vrot.slane %v661, 4
    %v663 = vsel %vm659, %v662, %v642
    %v665 = vrot.slane %v663, 3
    %v667 = vsel %vm640, 0.0, %v665
    %v668 = vrot.slane %v663, 1
    %v670 = vsel %vm641, 0.0, %v668
    %v671 = vsub.f32 %v642, %v654
    %v672 = vsub.f32 %v642, %v658
    %v673 = vsub.f32 %v642, %v667
    %v674 = vsub.f32 %v642, %v670
    %v675 = vmul.f32 %v671, %v671
    %v676 = vmul.f32 %v672, %v672
    %v677 = vadd.f32 %v675, %v676
    %v678 = vmul.f32 %v673, %v673
    %v679 = vadd.f32 %v677, %v678
    %v680 = vmul.f32 %v674, %v674
    %v681 = vadd.f32 %v679, %v680
    %682 = vst.msk [vmem:[#allocation8] sm:$0xf] %vm559, %v681
    %v683 = vld [vmem:[%s632] sm:$0xf]
    %684 = vrot.lane.b32.xlu0 %v683, 4
    %v685 = vpop.permute.xlu0 %684
    %v686 = vsel %vm643, %v685, %v683
    %687 = vrot.lane.b32.xlu0 %v686, 4
    %v688 = vpop.permute.xlu0 %687
    %v689 = vsel %vm643, %v688, %v683
    %691 = vrot.lane.b32.xlu0 %v689, 125
    %v692 = vpop.permute.xlu0 %691
    %v694 = vsel %vm638, 0.0, %v692
    %695 = vrot.lane.b32.xlu0 %v689, 127
    %v696 = vpop.permute.xlu0 %695
    %v698 = vsel %vm639, 0.0, %v696
    %v699 = vrot.slane %v683, 4
    %v700 = vsel %vm659, %v699, %v683
    %v701 = vrot.slane %v700, 4
    %v702 = vsel %vm659, %v701, %v683
    %v704 = vrot.slane %v702, 3
    %v706 = vsel %vm640, 0.0, %v704
    %v707 = vrot.slane %v702, 1
    %v709 = vsel %vm641, 0.0, %v707
    %v710 = vsub.f32 %v683, %v694
    %v711 = vsub.f32 %v683, %v698
    %v712 = vsub.f32 %v683, %v706
    %v713 = vsub.f32 %v683, %v709
    %v714 = vmul.f32 %v710, %v710
    %v715 = vmul.f32 %v711, %v711
    %v716 = vadd.f32 %v714, %v715
    %v717 = vmul.f32 %v712, %v712
    %v718 = vadd.f32 %v716, %v717
    %v719 = vmul.f32 %v713, %v713
    %v720 = vadd.f32 %v718, %v719
    %s721 = scalar_lea.vmem [#allocation8], 4
    %722 = vst.msk [vmem:[%s721] sm:$0xf] %vm559, %v720
    // Predicated region
    $region26: #{tpu_custom_call.1} parent=1 // pred_check
      _
    $region27: #{tpu_custom_call.1} parent=1 // pred_check_branch
      %724 = sbr.rel (0) target = $region29
    $region28: #{tpu_custom_call.1} parent=1 // pred_region
      %s726 = ssub.s32 128, 128
      %727 = vsyncadd [#allocation5], %s726
      %s728 = sshll.u32 [#allocation8], 4
      %s729 = int_to_ptr.vmem [resolvable:$true] %s728
      %734 = dma.vmem_to_hbm [thread:$0]  %s729, 128, %s4, [#allocation5], 64, 64, 4
    $region29: #{tpu_custom_call.1} parent=1 // pred_fallthru
      _
    // Predicated region
    $region30: #{tpu_custom_call.1} parent=1 // pred_check
      _
    $region31: #{tpu_custom_call.1} parent=1 // pred_check_branch
      %736 = sbr.rel (0) target = $region33
    $region32: #{tpu_custom_call.1} parent=1 // pred_region
      %737 = dma.done [#allocation5], 128
    $region33: #{tpu_custom_call.1} parent=1 // pred_fallthru
      _
    %738 = vsyncpa [#allocation4], 1
    %739 = vsyncpa [#allocation7], 1
    %740 = vsyncpa [#allocation5], 1

</llo_original>
